<compile_context>
chip_gen: v5e
topology: v5e:2x2
jax: 0.10.0
libtpu: 0.0.40
codegen_flags: <defaults>
</compile_context>

<pallas_src>
import functools

import jax
import jax.numpy as jnp
import numpy as np
from jax.experimental import pallas as pl
from jax.experimental.pallas import tpu as pltpu


# The PyTorch module samples one of these at __init__; we mirror that with a
# deterministic (seeded) choice and bake the selection into the kernel as a
# static Python callable.
ACTIVATIONS = {
    "square": jnp.square,
    "relu": lambda x: jnp.maximum(x, 0.0),
    "tanh": jnp.tanh,
    "identity": lambda x: x,
}


def scm_kernel(act_fn, w_ref, x_ref, noise_ref, out_ref):
    """out = act(sum_p w[p] * x[p]) + noise, on one (TM, C) row tile.

    w_ref:     (P,)         SMEM -- Linear(P -> 1, bias=False) weights
    x_ref:     (P, TM, C)   VMEM -- stacked parent values (row tile)
    noise_ref: (TM, C)      VMEM -- constant additive noise (row tile)
    out_ref:   (TM, C)      VMEM
    """
    n_parents = x_ref.shape[0]
    # Hoist the scalar weight reads once per tile; P is tiny & static so the
    # reduction fully unrolls into VPU multiply-adds.
    acc = w_ref[0] * x_ref[0]
    for p in range(1, n_parents):
        acc = acc + w_ref[p] * x_ref[p]
    out_ref[...] = act_fn(acc) + noise_ref[...]


def _choose_lane_width(n_elems, max_lanes=4096):
    """Largest multiple of 128 dividing n_elems (<= max_lanes), preferring
    widths whose row count (n_elems // C) is a multiple of 8 so blocks are made
    of full (8,128) vreg tiles.  Returns 0 if n_elems is not a multiple of 128."""
    best_any, best_full = 0, 0
    c = 128
    while c <= min(n_elems, max_lanes):
        if n_elems % c == 0:
            best_any = c
            rows = n_elems // c
            if rows % 8 == 0 or rows == 1:
                best_full = c
        c += 128
    return best_full or best_any


def _choose_tile_rows(rows, n_parents, lanes, vmem_budget_bytes=16 << 20):
    """Largest row tile that (a) keeps the double-buffered VMEM footprint under
    the budget (safe vs. v7x's 32 MiB scoped default / 64 MiB physical),
    (b) divides `rows`, and (c) leaves >=2 grid blocks for large inputs so the
    'parallel' grid axis can shard across v7x's two TensorCores."""
    row_bytes = (n_parents + 2) * lanes * 4              # x rows + noise row + out row, f32
    cap = max(1, vmem_budget_bytes // (2 * row_bytes))   # 2x: double buffering
    if rows >= 128:                                      # enough work to amortize 2+ steps
        cap = min(cap, rows // 2)
    if cap >= rows:
        return rows                                      # single full-dim block is legal
    tm = (cap // 8) * 8
    while tm >= 8:
        if rows % tm == 0:
            return tm
        tm -= 8
    # TODO(synk): pad `rows` to a multiple of 8 for ragged shapes instead of
    # falling back to a single (possibly over-budget) block.
    return rows


def structural_equation_forward(parent_stack, weight, noise, *, activation="tanh"):
    """parent_stack: (P,) + samples_shape f32; weight: (P,) f32;
    noise: samples_shape f32.  Returns activation(<parents, w>) + noise."""
    n_parents = parent_stack.shape[0]
    samples_shape = noise.shape
    if n_parents == 0:
        return noise                                     # module semantics: noise only

    act_fn = ACTIVATIONS[activation]
    n_elems = int(np.prod(samples_shape))
    lanes = _choose_lane_width(n_elems)
    if lanes == 0:
        # TODO(synk): samples whose element count is not a multiple of 128
        # lanes fall back to the plain XLA path (tiny shapes anyway).
        lin = weight[0] * parent_stack[0]
        for p in range(1, n_parents):
            lin = lin + weight[p] * parent_stack[p]
        return act_fn(lin) + noise

    rows = n_elems // lanes
    tile_rows = _choose_tile_rows(rows, n_parents, lanes)
    grid = (rows // tile_rows,)

    # Free row-major reinterpretations (no transpose / data movement).
    x = parent_stack.reshape(n_parents, rows, lanes)
    nz = noise.reshape(rows, lanes)

    out = pl.pallas_call(
        functools.partial(scm_kernel, act_fn),
        out_shape=jax.ShapeDtypeStruct((rows, lanes), jnp.float32),
        grid=grid,
        in_specs=[
            pl.BlockSpec(memory_space=pltpu.MemorySpace.SMEM),        # weights, untiled
            pl.BlockSpec((n_parents, tile_rows, lanes), lambda i: (0, i, 0)),
            pl.BlockSpec((tile_rows, lanes), lambda i: (i, 0)),
        ],
        out_specs=pl.BlockSpec((tile_rows, lanes), lambda i: (i, 0)),
        # The constant noise is consumed exactly once and matches the output
        # shape/dtype -> reuse its HBM buffer for the result.
        input_output_aliases={2: 0},
        compiler_params=pltpu.CompilerParams(
            dimension_semantics=("parallel",)),
        cost_estimate=pl.CostEstimate(
            flops=2 * n_parents * n_elems,
            transcendentals=n_elems if activation == "tanh" else 0,
            bytes_accessed=(n_parents + 2) * n_elems * 4),
    )(weight, x, nz)
    return out.reshape(samples_shape)


if __name__ == "__main__":
    # --- deterministic module setup (mirrors __init__) ---
    parents = ["x1", "x2", "x3", "x4"]        # P = 4
    n_parents = len(parents)
    samples_shape = (16, 128)                 # small, TPU-tile friendly
    noise_std = 0.1

    # activation_sampling(): np.random.choice over the four activations,
    # replicated deterministically with a fixed numpy seed.
    np.random.seed(0)
    act_name = str(np.random.choice(["square", "relu", "tanh", "identity"]))

    key = jax.random.PRNGKey(0)
    k_w, k_n, k_x = jax.random.split(key, 3)

    # nn.Linear(P, 1, bias=False): weight ~ U(-1/sqrt(P), 1/sqrt(P))
    bound = 1.0 / float(np.sqrt(n_parents))
    weight = jax.random.uniform(k_w, (n_parents,), jnp.float32, -bound, bound)

    # additive_noise ~ Normal(0, noise_std), sampled once, shape samples_shape
    noise = noise_std * jax.random.normal(k_n, samples_shape, jnp.float32)

    # forward(**kwargs): one tensor of samples_shape per parent, stacked.
    parent_values = jax.random.normal(
        k_x, (n_parents,) + samples_shape, jnp.float32)

    out = structural_equation_forward(
        parent_values, weight, noise, activation=act_name)
    out = jax.block_until_ready(out)

    # reference (plain JAX): weighted sum over parents, activation, + noise
    lin = weight[0] * parent_values[0]
    for p in range(1, n_parents):
        lin = lin + weight[p] * parent_values[p]
    ref = ACTIVATIONS[act_name](lin) + noise

    assert out.shape == samples_shape
    assert jnp.allclose(out, ref, atol=1e-5, rtol=1e-5)
    print("KERNEL_OK")
</pallas_src>

<mosaic_0001>
module attributes {stable_mosaic.version = 11 : i64} {
  func.func @scm_kernel(%arg0: i32, %arg1: memref<4xf32, #tpu.memory_space<smem>>, %arg2: memref<4x1x2048xf32, #tpu.memory_space<vmem>>, %arg3: memref<1x2048xf32, #tpu.memory_space<vmem>>, %arg4: memref<1x2048xf32, #tpu.memory_space<vmem>>) attributes {dimension_semantics = [#tpu.dimension_semantics<parallel>], iteration_bounds = array<i64: 1>, scalar_prefetch = 0 : i64, scratch_operands = 0 : i64, tpu.core_type = #tpu.core_type<tc>, window_params = [{transform_indices = @transform_0, window_bounds = array<i64: 4>}, {transform_indices = @transform_1, window_bounds = array<i64: 4, 1, 2048>}, {transform_indices = @transform_2, window_bounds = array<i64: 1, 2048>}, {transform_indices = @transform_3, window_bounds = array<i64: 1, 2048>}]} {
    %c0 = arith.constant 0 : index
    %0 = memref.load %arg1[%c0] : memref<4xf32, #tpu.memory_space<smem>>
    %c0_0 = arith.constant 0 : index
    %c0_1 = arith.constant 0 : index
    %c0_2 = arith.constant 0 : index
    %1 = vector.load %arg2[%c0_0, %c0_1, %c0_2] : memref<4x1x2048xf32, #tpu.memory_space<vmem>>, vector<1x1x2048xf32>
    %2 = vector.shape_cast %1 : vector<1x1x2048xf32> to vector<1x2048xf32>
    %3 = vector.broadcast %0 : f32 to vector<1x2048xf32>
    %4 = arith.mulf %3, %2 : vector<1x2048xf32>
    %c1 = arith.constant 1 : index
    %5 = memref.load %arg1[%c1] : memref<4xf32, #tpu.memory_space<smem>>
    %c1_3 = arith.constant 1 : index
    %c0_4 = arith.constant 0 : index
    %c0_5 = arith.constant 0 : index
    %6 = vector.load %arg2[%c1_3, %c0_4, %c0_5] : memref<4x1x2048xf32, #tpu.memory_space<vmem>>, vector<1x1x2048xf32>
    %7 = vector.shape_cast %6 : vector<1x1x2048xf32> to vector<1x2048xf32>
    %8 = vector.broadcast %5 : f32 to vector<1x2048xf32>
    %9 = arith.mulf %8, %7 : vector<1x2048xf32>
    %10 = arith.addf %4, %9 : vector<1x2048xf32>
    %c2 = arith.constant 2 : index
    %11 = memref.load %arg1[%c2] : memref<4xf32, #tpu.memory_space<smem>>
    %c2_6 = arith.constant 2 : index
    %c0_7 = arith.constant 0 : index
    %c0_8 = arith.constant 0 : index
    %12 = vector.load %arg2[%c2_6, %c0_7, %c0_8] : memref<4x1x2048xf32, #tpu.memory_space<vmem>>, vector<1x1x2048xf32>
    %13 = vector.shape_cast %12 : vector<1x1x2048xf32> to vector<1x2048xf32>
    %14 = vector.broadcast %11 : f32 to vector<1x2048xf32>
    %15 = arith.mulf %14, %13 : vector<1x2048xf32>
    %16 = arith.addf %10, %15 : vector<1x2048xf32>
    %c3 = arith.constant 3 : index
    %17 = memref.load %arg1[%c3] : memref<4xf32, #tpu.memory_space<smem>>
    %c3_9 = arith.constant 3 : index
    %c0_10 = arith.constant 0 : index
    %c0_11 = arith.constant 0 : index
    %18 = vector.load %arg2[%c3_9, %c0_10, %c0_11] : memref<4x1x2048xf32, #tpu.memory_space<vmem>>, vector<1x1x2048xf32>
    %19 = vector.shape_cast %18 : vector<1x1x2048xf32> to vector<1x2048xf32>
    %20 = vector.broadcast %17 : f32 to vector<1x2048xf32>
    %21 = arith.mulf %20, %19 : vector<1x2048xf32>
    %22 = arith.addf %16, %21 : vector<1x2048xf32>
    %23 = arith.mulf %22, %22 : vector<1x2048xf32>
    %c0_12 = arith.constant 0 : index
    %c0_13 = arith.constant 0 : index
    %24 = vector.load %arg3[%c0_12, %c0_13] : memref<1x2048xf32, #tpu.memory_space<vmem>>, vector<1x2048xf32>
    %25 = arith.addf %23, %24 : vector<1x2048xf32>
    %c0_14 = arith.constant 0 : index
    %c0_15 = arith.constant 0 : index
    %26 = vector.load %arg4[%c0_14, %c0_15] : memref<1x2048xf32, #tpu.memory_space<vmem>>, vector<1x2048xf32>
    tpu.vector_store %arg4[%c0_14, %c0_15], %25 {strides = array<i32>} : memref<1x2048xf32, #tpu.memory_space<vmem>>, vector<1x2048xf32>,
    return
  }
  func.func @transform_0(%arg0: i32) -> i32 {
    %c0_i32 = arith.constant 0 : i32
    %c0_i32_0 = arith.constant 0 : i32
    return %c0_i32 : i32
  }
  func.func @transform_1(%arg0: i32) -> (i32, i32, i32) {
    %c0_i32 = arith.constant 0 : i32
    %c0_i32_0 = arith.constant 0 : i32
    %c0_i32_1 = arith.constant 0 : i32
    return %c0_i32, %arg0, %c0_i32_0 : i32, i32, i32
  }
  func.func @transform_2(%arg0: i32) -> (i32, i32) {
    %c0_i32 = arith.constant 0 : i32
    %c0_i32_0 = arith.constant 0 : i32
    return %arg0, %c0_i32 : i32, i32
  }
  func.func @transform_3(%arg0: i32) -> (i32, i32) {
    %c0_i32 = arith.constant 0 : i32
    %c0_i32_0 = arith.constant 0 : i32
    return %arg0, %c0_i32 : i32, i32
  }
}

</mosaic_0001>

<llo_original>
// kernel: tpu_custom_call.1
$region0: #{tpu_custom_call.1}
  #allocation0 [shape = 'u32[]', space=smem, size = 0x4, offset = 0x4, fixed_abs, tag = 'smem constant byte address 0x4 - core index']
  #allocation1 [shape = 'u32[72,128]{1,0:T(1,128)}', space=vmem, size = 0x9000, scoped, tag = 'internal scratch']
  %s0 = inlined_call_operand.vmem [shape: f32[4], index: 0, kind: input, shape index: {}]
  %s1 = inlined_call_operand.hbm [shape: f32[4,1,2048], index: 1, kind: input, shape index: {}]
  %s2 = inlined_call_operand.hbm [shape: f32[1,2048], index: 2, kind: input, shape index: {}, may-alias: {2,3}]
  %s3 = inlined_call_operand.hbm [shape: f32[1,2048], index: 3, kind: output, shape index: {}, may-alias: {2,3}]
  %s4 = sld [smem:[#allocation0]]
  $region34: #{tpu_custom_call.1} parent=0
    _
  %s6 = ssub.s32 1, %s4
  %s7 = scalar_select 0, %s6, %s4
  $region1: #{tpu_custom_call.1} parent=0
    #allocation2 [shape = 'u8[512]{0}', space=smem, size = 0x200, scoped, tag = 'input window, operand 0, single buffered']
    #allocation3 [shape = 's32[1]{0}', space=sflag, size = 0x4, scoped, tag = 'scoped memory for tpu_custom_call.1']
    #allocation4 [shape = 's32[1]{0}', space=sflag, size = 0x4, scoped, tag = 'scoped memory for tpu_custom_call.1']
    #allocation5 [shape = 's32[1]{0}', space=sflag, size = 0x4, scoped, tag = 'scoped memory for tpu_custom_call.1']
    #allocation6 [shape = 'u8[32768]{0}', space=vmem, size = 0x8000, scoped, tag = 'input window, operand 1, single buffered']
    #allocation7 [shape = 'u8[8192]{0}', space=vmem, size = 0x2000, scoped, tag = 'input window, operand 2, single buffered']
    #allocation8 [shape = 's32[1]{0}', space=sflag, size = 0x4, scoped, tag = 'scoped memory for tpu_custom_call.1']
    #allocation9 [shape = 'u8[8192]{0}', space=vmem, size = 0x2000, scoped, tag = 'output window, operand 0, single buffered']
    %8 = vsyncpa [#allocation5], 0
    %9 = vsyncpa [#allocation3], 0
    %10 = vsyncpa [#allocation8], 0
    %11 = vsyncpa [#allocation4], 0
    // Predicated region
    $region2: #{tpu_custom_call.1} parent=1 // pred_check
      _
    $region3: #{tpu_custom_call.1} parent=1 // pred_check_branch
      %13 = sbr.rel (0) target = $region5
    $region4: #{tpu_custom_call.1} parent=1 // pred_region
      %15 = vsyncadd [#allocation5], 0
      %s17 = sshll.u32 %s0, 4
      %s18 = int_to_ptr.vmem [resolvable:$true] %s17
      %20 = dma.vmem_to_smem %s18, 16, [#allocation2], [#allocation5]
    $region5: #{tpu_custom_call.1} parent=1 // pred_fallthru
      _
    // Predicated region
    $region6: #{tpu_custom_call.1} parent=1 // pred_check
      _
    $region7: #{tpu_custom_call.1} parent=1 // pred_check_branch
      %22 = sbr.rel (0) target = $region9
    $region8: #{tpu_custom_call.1} parent=1 // pred_region
      %24 = vsyncadd [#allocation3], 0
      %s25 = sshll.u32 %s1, 4
      %s26 = int_to_ptr.hbm [resolvable:$true] %s25
      %s27 = sshll.u32 [#allocation6], 4
      %s28 = int_to_ptr.vmem [resolvable:$true] %s27
      %33 = dma.hbm_to_vmem [thread:$0]  %s26, 1024, %s28, [#allocation3], 256, 256, 16
    $region9: #{tpu_custom_call.1} parent=1 // pred_fallthru
      _
    // Predicated region
    $region10: #{tpu_custom_call.1} parent=1 // pred_check
      _
    $region11: #{tpu_custom_call.1} parent=1 // pred_check_branch
      %35 = sbr.rel (0) target = $region13
    $region12: #{tpu_custom_call.1} parent=1 // pred_region
      %37 = vsyncadd [#allocation8], 0
      %s39 = sshll.u32 %s2, 4
      %s40 = int_to_ptr.hbm [resolvable:$true] %s39
      %s41 = sshll.u32 [#allocation7], 4
      %s42 = int_to_ptr.vmem [resolvable:$true] %s41
      %44 = dma.hbm_to_vmem [thread:$0]  %s40, 256, %s42, [#allocation8]
    $region13: #{tpu_custom_call.1} parent=1 // pred_fallthru
      _
    // Predicated region
    $region14: #{tpu_custom_call.1} parent=1 // pred_check
      _
    $region15: #{tpu_custom_call.1} parent=1 // pred_check_branch
      %46 = sbr.rel (0) target = $region17
    $region16: #{tpu_custom_call.1} parent=1 // pred_region
      %48 = dma.done [#allocation5], 16
    $region17: #{tpu_custom_call.1} parent=1 // pred_fallthru
      _
    // Predicated region
    $region18: #{tpu_custom_call.1} parent=1 // pred_check
      _
    $region19: #{tpu_custom_call.1} parent=1 // pred_check_branch
      %50 = sbr.rel (0) target = $region21
    $region20: #{tpu_custom_call.1} parent=1 // pred_region
      %52 = dma.done [#allocation3], 1024
    $region21: #{tpu_custom_call.1} parent=1 // pred_fallthru
      _
    // Predicated region
    $region22: #{tpu_custom_call.1} parent=1 // pred_check
      _
    $region23: #{tpu_custom_call.1} parent=1 // pred_check_branch
      %54 = sbr.rel (0) target = $region25
    $region24: #{tpu_custom_call.1} parent=1 // pred_region
      %56 = dma.done [#allocation8], 256
    $region25: #{tpu_custom_call.1} parent=1 // pred_fallthru
      _
    %57 = sfence
    %s58 = sld [smem:[#allocation2]]
    %v59 = vld [vmem:[#allocation6] sm:$0xff]
    %v60 = vld [vmem:[#allocation6 + $0x8] sm:$0xff]
    %v61 = vstv %s58
    %v62 = vmul.f32 %v61, %v59
    %v63 = vmul.f32 %v61, %v60
    %s64 = sld [smem:[#allocation2 + $0x1]]
    %s65 = scalar_lea.vmem [#allocation6], 16
    %v66 = vld [vmem:[%s65] sm:$0xff]
    %v67 = vld [vmem:[%s65 + $0x8] sm:$0xff]
    %v68 = vstv %s64
    %v69 = vmul.f32 %v68, %v66
    %v70 = vmul.f32 %v68, %v67
    %v71 = vadd.f32 %v62, %v69
    %v72 = vadd.f32 %v63, %v70
    %s73 = sld [smem:[#allocation2 + $0x2]]
    %s74 = scalar_lea.vmem [#allocation6], 32
    %v75 = vld [vmem:[%s74] sm:$0xff]
    %v76 = vld [vmem:[%s74 + $0x8] sm:$0xff]
    %v77 = vstv %s73
    %v78 = vmul.f32 %v77, %v75
    %v79 = vmul.f32 %v77, %v76
    %v80 = vadd.f32 %v71, %v78
    %v81 = vadd.f32 %v72, %v79
    %s82 = sld [smem:[#allocation2 + $0x3]]
    %s83 = scalar_lea.vmem [#allocation6], 48
    %v84 = vld [vmem:[%s83] sm:$0xff]
    %v85 = vld [vmem:[%s83 + $0x8] sm:$0xff]
    %v86 = vstv %s82
    %v87 = vmul.f32 %v86, %v84
    %v88 = vmul.f32 %v86, %v85
    %v89 = vadd.f32 %v80, %v87
    %v90 = vadd.f32 %v81, %v88
    %v91 = vmul.f32 %v89, %v89
    %v92 = vmul.f32 %v90, %v90
    %v93 = vld [vmem:[#allocation7] sm:$0xff]
    %v94 = vld [vmem:[#allocation7 + $0x8] sm:$0xff]
    %v95 = vadd.f32 %v91, %v93
    %v96 = vadd.f32 %v92, %v94
    %97 = vst [vmem:[#allocation9] sm:$0xff] %v95
    %98 = vst [vmem:[#allocation9 + $0x8] sm:$0xff] %v96
    // Predicated region
    $region26: #{tpu_custom_call.1} parent=1 // pred_check
      _
    $region27: #{tpu_custom_call.1} parent=1 // pred_check_branch
      %100 = sbr.rel (0) target = $region29
    $region28: #{tpu_custom_call.1} parent=1 // pred_region
      %102 = vsyncadd [#allocation4], 0
      %s104 = sshll.u32 [#allocation9], 4
      %s105 = int_to_ptr.vmem [resolvable:$true] %s104
      %s106 = sshll.u32 %s3, 4
      %s107 = int_to_ptr.hbm [resolvable:$true] %s106
      %109 = dma.vmem_to_hbm [thread:$0]  %s105, 256, %s107, [#allocation4]
    $region29: #{tpu_custom_call.1} parent=1 // pred_fallthru
      _
    // Predicated region
    $region30: #{tpu_custom_call.1} parent=1 // pred_check
      _
    $region31: #{tpu_custom_call.1} parent=1 // pred_check_branch
      %111 = sbr.rel (0) target = $region33
    $region32: #{tpu_custom_call.1} parent=1 // pred_region
      %113 = dma.done [#allocation4], 256
    $region33: #{tpu_custom_call.1} parent=1 // pred_fallthru
      _
    %114 = vsyncpa [#allocation3], 1
    %115 = vsyncpa [#allocation8], 1
    %116 = vsyncpa [#allocation4], 1
    %117 = vsyncpa [#allocation5], 1

</llo_original>
